<compile_context>
chip_gen: v7x
topology: tpu7x:2x2x1
jax: 0.10.0
libtpu: 0.0.40
codegen_flags: <defaults>
</compile_context>

<pallas_src>
import functools

import jax
import jax.numpy as jnp
from jax import lax
from jax.experimental import pallas as pl
from jax.experimental.pallas import tpu as pltpu

_MIB = 1024 * 1024


@functools.lru_cache(maxsize=1)
def _vmem_budgets():
    """Per-generation sizing: (pipeline block budget, vmem_limit_bytes)."""
    try:
        cap = pltpu.get_tpu_info().vmem_capacity_bytes
    except Exception:  # pragma: no cover - fall back to v7x-safe numbers
        cap = 64 * _MIB
    if cap >= 96 * _MIB:          # v5e / v6e: 128 MiB physical VMEM, HBM-bound
        return 88 * _MIB, 100 * _MIB
    # v7x: 64 MiB per TensorCore -> leave headroom for f32 temporaries
    return 26 * _MIB, 48 * _MIB


def _microbn_kernel(x_ref, w_ref, b_ref, o_ref, *, eps, n_total, nb, c_tile):
    """One (micro-batch, channel-tile) block.

    x_ref : (nb, c_tile, HW)  input slab (batch, channel, flattened spatial)
    w_ref : (c_pad, 1)        affine weight (fully VMEM-resident)
    b_ref : (c_pad, 1)        affine bias   (fully VMEM-resident)
    o_ref : (nb, c_tile, HW)  output slab
    """
    x = x_ref[...].astype(jnp.float32)          # (nb, c_tile, hw)
    hw = x.shape[2]

    if n_total % nb == 0:
        # Every micro-batch is full: no masking at all (static branch).
        row_mask = None
        inv_cnt = 1.0 / float(nb * hw)
    else:
        # Ragged last micro-batch: Pallas only copies the in-bounds rows of
        # the trailing block; the remaining VMEM rows hold stale data.  Mask
        # the O(nb*c_tile) per-row partial sums (NOT the full tile) and use
        # the true element count.  Full output rows for padded batch entries
        # are dropped by Pallas at store time.
        mb = pl.program_id(0)
        valid = jnp.minimum(n_total - mb * nb, nb)              # scalar int32
        row_idx = lax.broadcasted_iota(jnp.int32, (nb, 1, 1), 0)
        row_mask = row_idx < valid                               # (nb, 1, 1)
        inv_cnt = 1.0 / (valid * hw).astype(jnp.float32)

    # Per-channel mean: lane reduce over HW, mask per-row sums, reduce batch.
    row_s1 = jnp.sum(x, axis=2, keepdims=True)                   # (nb, c_tile, 1)
    if row_mask is not None:
        row_s1 = jnp.where(row_mask, row_s1, 0.0)
    mean = jnp.sum(row_s1, axis=0, keepdims=True) * inv_cnt      # (1, c_tile, 1)

    # Two-pass biased variance on the VMEM-resident tile.
    diff = x - mean
    row_s2 = jnp.sum(diff * diff, axis=2, keepdims=True)         # (nb, c_tile, 1)
    if row_mask is not None:
        row_s2 = jnp.where(row_mask, row_s2, 0.0)
    var = jnp.sum(row_s2, axis=0, keepdims=True) * inv_cnt       # (1, c_tile, 1)

    inv_std = lax.rsqrt(var + eps)                               # EUP

    if w_ref.shape[0] == c_tile:
        # Single channel tile: static full-ref read.
        w = w_ref[...][None]                                     # (1, c_tile, 1)
        b = b_ref[...][None]
    else:
        # Slice this grid step's channels out of the resident (c_pad, 1) array.
        off = pl.multiple_of(pl.program_id(1) * c_tile, c_tile)
        w = w_ref[pl.ds(off, c_tile), :][None]
        b = b_ref[pl.ds(off, c_tile), :][None]

    scale = inv_std * w
    shift = b - mean * scale
    o_ref[...] = (x * scale + shift).astype(o_ref.dtype)


def _choose_c_tile(c, nb, hw, itemsize, budget):
    """Channel tile: full C if C<=8, else the largest multiple of 8 whose
    per-block footprint (double-buffered in+out blocks at input dtype, plus
    ~2 full-size f32 in-kernel temporaries) fits `budget`."""
    if c <= 8:
        return c
    per_channel = nb * hw * (4 * itemsize + 2 * 4)
    fit = max(8, (budget // max(per_channel, 1)) // 8 * 8)
    return int(min(c, fit))


@functools.partial(jax.jit, static_argnames=("eps", "mbsz"))
def microbn_forward(x, weight, bias, *, eps, mbsz):
    n, c, h, w = x.shape
    hw = h * w
    x3 = x.reshape(n, c, hw)                       # free reshape of NCHW

    nb = min(mbsz, n)                              # batch rows per block
    num_mb = -(-n // nb)                           # == ceil(n / mbsz)
    itemsize = x.dtype.itemsize

    pipe_budget, vmem_limit = _vmem_budgets()
    c_tile = _choose_c_tile(c, nb, hw, itemsize, pipe_budget)
    num_c = -(-c // c_tile)

    # Guarantee >=2 parallel grid points so v7x's two TensorCores both work
    # (negligible extra per-step overhead on single-TC v5e/v6e).
    if num_mb == 1 and num_c == 1 and c >= 16:
        c_tile = max(8, ((-(-c // 2)) + 7) // 8 * 8)
        if c_tile >= c:
            c_tile = c
        num_c = -(-c // c_tile)

    # weight/bias kept fully resident in VMEM, padded to a whole number of
    # channel tiles so in-kernel slices never go out of bounds.
    c_pad = num_c * c_tile
    w_col = jnp.pad(weight.astype(jnp.float32), (0, c_pad - c)).reshape(c_pad, 1)
    b_col = jnp.pad(bias.astype(jnp.float32), (0, c_pad - c)).reshape(c_pad, 1)

    total_bytes = n * c * hw * itemsize
    kernel = functools.partial(_microbn_kernel, eps=eps, n_total=n, nb=nb,
                               c_tile=c_tile)

    y3 = pl.pallas_call(
        kernel,
        out_shape=jax.ShapeDtypeStruct((n, c, hw), x.dtype),
        grid_spec=pl.GridSpec(
            grid=(num_mb, num_c),
            in_specs=[
                pl.BlockSpec((nb, c_tile, hw), lambda mb, ci: (mb, ci, 0)),
                pl.BlockSpec(memory_space=pltpu.MemorySpace.VMEM),   # weight
                pl.BlockSpec(memory_space=pltpu.MemorySpace.VMEM),   # bias
            ],
            out_specs=pl.BlockSpec((nb, c_tile, hw), lambda mb, ci: (mb, ci, 0)),
        ),
        compiler_params=pltpu.CompilerParams(
            dimension_semantics=("parallel", "parallel"),
            vmem_limit_bytes=int(vmem_limit),
        ),
        cost_estimate=pl.CostEstimate(
            flops=7 * n * c * hw,                  # sums + sq + normalize
            transcendentals=num_mb * c,            # rsqrt per channel per mb
            bytes_accessed=2 * total_bytes + 2 * c_pad * 4,
        ),
    )(x3, w_col, b_col)

    return y3.reshape(n, c, h, w)


class MicroBatchNorm:
    """JAX/Pallas port of _MicroBatchNorm (forward, training mode)."""

    def __init__(self, num_features, eps=1e-5, momentum=0.1, affine=True,
                 mbsz=128, *, key):
        self.num_features = num_features
        self.eps = eps
        self.momentum = momentum
        self.affine = affine
        self.mbsz = 128  # mirrors PyTorch: ctor arg `mbsz` is ignored
        if affine:
            # reset_parameters(): weight ~ U[0,1), bias = 0
            self.weight = jax.random.uniform(key, (num_features,), jnp.float32)
            self.bias = jnp.zeros((num_features,), jnp.float32)
        else:
            # F.batch_norm with weight=None/bias=None == scale 1, shift 0
            self.weight = jnp.ones((num_features,), jnp.float32)
            self.bias = jnp.zeros((num_features,), jnp.float32)
        self.running_mean = jnp.zeros((num_features,), jnp.float32)
        self.running_var = jnp.ones((num_features,), jnp.float32)

    def __call__(self, x):
        return microbn_forward(x, self.weight, self.bias,
                               eps=self.eps, mbsz=self.mbsz)


def _reference_forward(x, weight, bias, eps, mbsz=128):
    """Pure-JAX reference of the per-micro-batch training-mode batch_norm."""
    outs = []
    s = 0
    n = x.shape[0]
    while s < n:
        e = min(s + mbsz, n)
        xc = x[s:e]
        mean = jnp.mean(xc, axis=(0, 2, 3), keepdims=True)
        var = jnp.mean((xc - mean) ** 2, axis=(0, 2, 3), keepdims=True)
        y = (xc - mean) / jnp.sqrt(var + eps)
        y = y * weight.reshape(1, -1, 1, 1) + bias.reshape(1, -1, 1, 1)
        outs.append(y)
        s += mbsz
    return jnp.concatenate(outs, axis=0)


if __name__ == "__main__":
    key = jax.random.PRNGKey(0)
    k_x, k_w, k_x2 = jax.random.split(key, 3)

    # Primary small test: single (partial) micro-batch.
    N, C, H, W = 2, 4, 16, 16
    x = jax.random.normal(k_x, (N, C, H, W), dtype=jnp.float32)
    bn = MicroBatchNorm(num_features=C, eps=1e-5, momentum=0.1, affine=True, key=k_w)

    out = jax.block_until_ready(bn(x))
    ref = _reference_forward(x, bn.weight, bn.bias, bn.eps, bn.mbsz)
    assert out.shape == (N, C, H, W)
    assert jnp.allclose(out, ref, atol=1e-4, rtol=1e-4), "mismatch vs reference"

    # Ragged multi-micro-batch test: N=130 -> micro-batches of 128 and 2
    # (exercises the per-row-masked ragged-stats path).
    N2 = 130
    x2 = jax.random.normal(k_x2, (N2, C, H, W), dtype=jnp.float32)
    out2 = jax.block_until_ready(bn(x2))
    ref2 = _reference_forward(x2, bn.weight, bn.bias, bn.eps, bn.mbsz)
    assert out2.shape == (N2, C, H, W)
    assert jnp.allclose(out2, ref2, atol=1e-4, rtol=1e-4), "mismatch vs reference (ragged)"

    print("KERNEL_OK")
</pallas_src>

<mosaic_0001>
module attributes {stable_mosaic.version = 11 : i64} {
  func.func @_microbn_kernel(%arg0: i32, %arg1: i32, %arg2: memref<2x4x256xf32, #tpu.memory_space<vmem>>, %arg3: memref<4x1xf32, #tpu.memory_space<vmem>>, %arg4: memref<4x1xf32, #tpu.memory_space<vmem>>, %arg5: memref<2x4x256xf32, #tpu.memory_space<vmem>>) attributes {dimension_semantics = [#tpu.dimension_semantics<parallel>, #tpu.dimension_semantics<parallel>], iteration_bounds = array<i64: 1, 1>, scalar_prefetch = 0 : i64, scratch_operands = 0 : i64, tpu.core_type = #tpu.core_type<tc>, window_params = [{transform_indices = @transform_0, window_bounds = array<i64: 2, 4, 256>}, {pipeline_mode = #tpu.pipeline_mode<synchronous>, transform_indices = @transform_1, window_bounds = array<i64: 4, 1>}, {pipeline_mode = #tpu.pipeline_mode<synchronous>, transform_indices = @transform_2, window_bounds = array<i64: 4, 1>}, {transform_indices = @transform_3, window_bounds = array<i64: 2, 4, 256>}]} {
    %c0 = arith.constant 0 : index
    %c0_0 = arith.constant 0 : index
    %c0_1 = arith.constant 0 : index
    %0 = vector.load %arg2[%c0, %c0_0, %c0_1] : memref<2x4x256xf32, #tpu.memory_space<vmem>>, vector<2x4x256xf32>
    %cst = arith.constant dense<0.000000e+00> : vector<2x4xf32>
    %1 = vector.multi_reduction <add>, %0, %cst [2] : vector<2x4x256xf32> to vector<2x4xf32>
    %2 = vector.shape_cast %1 : vector<2x4xf32> to vector<2x4x1xf32>
    %cst_2 = arith.constant dense<0.000000e+00> : vector<4x1xf32>
    %3 = vector.multi_reduction <add>, %2, %cst_2 [0] : vector<2x4x1xf32> to vector<4x1xf32>
    %4 = vector.shape_cast %3 : vector<4x1xf32> to vector<1x4x1xf32>
    %cst_3 = arith.constant 0.001953125 : f32
    %5 = vector.broadcast %cst_3 : f32 to vector<1x4x1xf32>
    %6 = arith.mulf %4, %5 : vector<1x4x1xf32>
    %7 = vector.broadcast %6 : vector<1x4x1xf32> to vector<2x4x256xf32>
    %8 = arith.subf %0, %7 : vector<2x4x256xf32>
    %9 = arith.mulf %8, %8 : vector<2x4x256xf32>
    %cst_4 = arith.constant dense<0.000000e+00> : vector<2x4xf32>
    %10 = vector.multi_reduction <add>, %9, %cst_4 [2] : vector<2x4x256xf32> to vector<2x4xf32>
    %11 = vector.shape_cast %10 : vector<2x4xf32> to vector<2x4x1xf32>
    %cst_5 = arith.constant dense<0.000000e+00> : vector<4x1xf32>
    %12 = vector.multi_reduction <add>, %11, %cst_5 [0] : vector<2x4x1xf32> to vector<4x1xf32>
    %13 = vector.shape_cast %12 : vector<4x1xf32> to vector<1x4x1xf32>
    %cst_6 = arith.constant 0.001953125 : f32
    %14 = vector.broadcast %cst_6 : f32 to vector<1x4x1xf32>
    %15 = arith.mulf %13, %14 : vector<1x4x1xf32>
    %cst_7 = arith.constant 9.99999974E-6 : f32
    %16 = vector.broadcast %cst_7 : f32 to vector<1x4x1xf32>
    %17 = arith.addf %15, %16 : vector<1x4x1xf32>
    %18 = math.rsqrt %17 : vector<1x4x1xf32>
    %c0_8 = arith.constant 0 : index
    %c0_9 = arith.constant 0 : index
    %19 = vector.load %arg3[%c0_8, %c0_9] : memref<4x1xf32, #tpu.memory_space<vmem>>, vector<4x1xf32>
    %20 = vector.shape_cast %19 : vector<4x1xf32> to vector<1x4x1xf32>
    %c0_10 = arith.constant 0 : index
    %c0_11 = arith.constant 0 : index
    %21 = vector.load %arg4[%c0_10, %c0_11] : memref<4x1xf32, #tpu.memory_space<vmem>>, vector<4x1xf32>
    %22 = vector.shape_cast %21 : vector<4x1xf32> to vector<1x4x1xf32>
    %23 = arith.mulf %18, %20 : vector<1x4x1xf32>
    %24 = arith.mulf %6, %23 : vector<1x4x1xf32>
    %25 = arith.subf %22, %24 : vector<1x4x1xf32>
    %26 = vector.broadcast %23 : vector<1x4x1xf32> to vector<2x4x256xf32>
    %27 = arith.mulf %0, %26 : vector<2x4x256xf32>
    %28 = vector.broadcast %25 : vector<1x4x1xf32> to vector<2x4x256xf32>
    %29 = arith.addf %27, %28 : vector<2x4x256xf32>
    %c0_12 = arith.constant 0 : index
    %c0_13 = arith.constant 0 : index
    %c0_14 = arith.constant 0 : index
    %30 = vector.load %arg5[%c0_12, %c0_13, %c0_14] : memref<2x4x256xf32, #tpu.memory_space<vmem>>, vector<2x4x256xf32>
    tpu.vector_store %arg5[%c0_12, %c0_13, %c0_14], %29 {strides = array<i32>} : memref<2x4x256xf32, #tpu.memory_space<vmem>>, vector<2x4x256xf32>,
    return
  }
  func.func @transform_0(%arg0: i32, %arg1: i32) -> (i32, i32, i32) {
    %c0_i32 = arith.constant 0 : i32
    %c0_i32_0 = arith.constant 0 : i32
    return %arg0, %arg1, %c0_i32 : i32, i32, i32
  }
  func.func @transform_1(%arg0: i32, %arg1: i32) -> (i32, i32) {
    %c0_i32 = arith.constant 0 : i32
    %c0_i32_0 = arith.constant 0 : i32
    %c0_i32_1 = arith.constant 0 : i32
    return %c0_i32, %c0_i32_0 : i32, i32
  }
  func.func @transform_2(%arg0: i32, %arg1: i32) -> (i32, i32) {
    %c0_i32 = arith.constant 0 : i32
    %c0_i32_0 = arith.constant 0 : i32
    %c0_i32_1 = arith.constant 0 : i32
    return %c0_i32, %c0_i32_0 : i32, i32
  }
  func.func @transform_3(%arg0: i32, %arg1: i32) -> (i32, i32, i32) {
    %c0_i32 = arith.constant 0 : i32
    %c0_i32_0 = arith.constant 0 : i32
    return %arg0, %arg1, %c0_i32 : i32, i32, i32
  }
}

</mosaic_0001>

<llo_original>
// kernel: microbn_forward.1
$region0: #{microbn_forward.1}
  #allocation0 [shape = 'u32[]', space=smem, size = 0x4, offset = 0x4, fixed_abs, tag = 'smem constant byte address 0x4 - core index']
  #allocation1 [shape = 'u32[144,128]{1,0:T(1,128)}', space=vmem, size = 0x12000, scoped, tag = 'internal scratch']
  %s0 = inlined_call_operand.vmem [shape: f32[2,4,256], index: 0, kind: input, shape index: {}]
  %s1 = inlined_call_operand.vmem [shape: f32[4,1], index: 1, kind: input, shape index: {}]
  %s2 = inlined_call_operand.vmem [shape: f32[4,1], index: 2, kind: input, shape index: {}]
  %s3 = inlined_call_operand.vmem [shape: f32[2,4,256], index: 3, kind: output, shape index: {}]
  %s4 = sld [smem:[#allocation0]]
  $region22: #{microbn_forward.1} parent=0
    _
  %s6 = ssub.s32 1, %s4
  %s7 = scalar_select 0, %s6, %s4
  // Predicated region
  $region2: #{microbn_forward.1} parent=0 // pred_check
    _
  $region3: #{microbn_forward.1} parent=0 // pred_check_branch
    %9 = sbr.rel (0) target = $region5
  $region4: #{microbn_forward.1} parent=0 // pred_region
    _
  $region5: #{microbn_forward.1} parent=0 // pred_fallthru
    _
  // Predicated region
  $region6: #{microbn_forward.1} parent=0 // pred_check
    _
  $region7: #{microbn_forward.1} parent=0 // pred_check_branch
    %11 = sbr.rel (0) target = $region9
  $region8: #{microbn_forward.1} parent=0 // pred_region
    _
  $region9: #{microbn_forward.1} parent=0 // pred_fallthru
    _
  // Predicated region
  $region10: #{microbn_forward.1} parent=0 // pred_check
    _
  $region11: #{microbn_forward.1} parent=0 // pred_check_branch
    %13 = sbr.rel (0) target = $region13
  $region12: #{microbn_forward.1} parent=0 // pred_region
    _
  $region13: #{microbn_forward.1} parent=0 // pred_fallthru
    _
  %v14 = vld [vmem:[%s0] sm:$0xff]
  %v15 = vld [vmem:[%s0 + $0x8] sm:$0xff]
  %v18 = vcombine.high %v14, %v14
  %v19 = vcombine.high %v15, %v15
  %vm22 = vcmask 1043456
  %v23 = vsel %vm22, %v14, 0.0
  %v24 = vsel %vm22, %v18, 0.0
  %v25 = vadd.f32 %v23, %v24
  %26 = vadd.xlane.f32.xlu0 %v25
  %v27 = vpop.xlane.xlu0 %26
  %v28 = vsel %vm22, %v15, 0.0
  %v29 = vsel %vm22, %v19, 0.0
  %v30 = vadd.f32 %v28, %v29
  %31 = vadd.xlane.f32.xlu0 %v30
  %v32 = vpop.xlane.xlu0 %31
  %v33 = vsel %vm22, %v27, 0.0
  %v34 = vsel %vm22, %v32, 0.0
  %v35 = vadd.f32 %v33, %v34
  %v36 = vmul.f32 %v35, 0.001953125
  %v39 = vunpack.c.l.s4 839922192
  %v40 = vunpack.c.0.s8 %v39
  %v41 = vlaneseq
  %v42 = vshrl.u32 %v41, 7
  %v43 = vsub.s32 %v40, %v42
  %v44 = vrot.slane %v36, %v43
  %v46 = vsub.f32 %v14, %v44
  %v47 = vsub.f32 %v15, %v44
  %v48 = vmul.f32 %v46, %v46
  %v49 = vmul.f32 %v47, %v47
  %v52 = vcombine.high %v48, %v48
  %v53 = vcombine.high %v49, %v49
  %v56 = vsel %vm22, %v48, 0.0
  %v57 = vsel %vm22, %v52, 0.0
  %v58 = vadd.f32 %v56, %v57
  %59 = vadd.xlane.f32.xlu0 %v58
  %v60 = vpop.xlane.xlu0 %59
  %v61 = vsel %vm22, %v49, 0.0
  %v62 = vsel %vm22, %v53, 0.0
  %v63 = vadd.f32 %v61, %v62
  %64 = vadd.xlane.f32.xlu0 %v63
  %v65 = vpop.xlane.xlu0 %64
  %v66 = vsel %vm22, %v60, 0.0
  %v67 = vsel %vm22, %v65, 0.0
  %v68 = vadd.f32 %v66, %v67
  %v69 = vmul.f32 %v68, 0.001953125
  %v70 = vadd.f32 %v69, 1e-05
  %v71 = vrsqrt.pop %v70
  %v72 = vld [vmem:[%s1] sm:$0xf]
  %v73 = vld [vmem:[%s2] sm:$0xf]
  %v74 = vmul.f32 %v71, %v72
  %v75 = vmul.f32 %v36, %v74
  %v76 = vsub.f32 %v73, %v75
  %78 = vset.pattern.permute.xlu0 0
  %79 = vperm.xlu0 %78, %v74
  %v80 = vpop.permute.xlu0 %79
  %v82 = vunpack.c.l.s4 839922192
  %v83 = vunpack.c.0.s8 %v82
  %v84 = vlaneseq
  %v85 = vshrl.u32 %v84, 7
  %v86 = vsub.s32 %v83, %v85
  %v87 = vrot.slane %v80, %v86
  %v89 = vmul.f32 %v14, %v87
  %v90 = vmul.f32 %v15, %v87
  %92 = vset.pattern.permute.xlu0 0
  %93 = vperm.xlu0 %92, %v76
  %v94 = vpop.permute.xlu0 %93
  %v96 = vunpack.c.l.s4 839922192
  %v97 = vunpack.c.0.s8 %v96
  %v98 = vlaneseq
  %v99 = vshrl.u32 %v98, 7
  %v100 = vsub.s32 %v97, %v99
  %v101 = vrot.slane %v94, %v100
  %v103 = vadd.f32 %v89, %v101
  %v104 = vadd.f32 %v90, %v101
  %105 = vst [vmem:[%s3] sm:$0xff] %v103
  %106 = vst [vmem:[%s3 + $0x8] sm:$0xff] %v104
  // Predicated region
  $region14: #{microbn_forward.1} parent=0 // pred_check
    _
  $region15: #{microbn_forward.1} parent=0 // pred_check_branch
    %108 = sbr.rel (0) target = $region17
  $region16: #{microbn_forward.1} parent=0 // pred_region
    _
  $region17: #{microbn_forward.1} parent=0 // pred_fallthru
    _
  // Predicated region
  $region18: #{microbn_forward.1} parent=0 // pred_check
    _
  $region19: #{microbn_forward.1} parent=0 // pred_check_branch
    %110 = sbr.rel (0) target = $region21
  $region20: #{microbn_forward.1} parent=0 // pred_region
    _
  $region21: #{microbn_forward.1} parent=0 // pred_fallthru
    _

</llo_original>
